<compile_context>
chip_gen: v6e
topology: v6e:2x2x1
jax: 0.10.0
libtpu: 0.0.40
codegen_flags: <defaults>
</compile_context>

<pallas_src>
import jax
import jax.numpy as jnp
from jax.experimental import pallas as pl
from jax.experimental.pallas import tpu as pltpu


def _round_up(x, m):
    return ((x + m - 1) // m) * m


def _pad_dim(d):
    # v6e/v7x MXU is 2x256x256: align larger feature dims to 256.
    # 128 is native on v5e and sufficient for small dims.
    return _round_up(d, 256) if d >= 256 else _round_up(d, 128)


def _linear_critic_kernel(x_ref, w1_ref, sc1_ref, w2_ref, sc2_ref, o_ref):
    """Fused LinearCritic forward on one batch tile.

    x_ref  : (TB, Dp)  bf16   input tile (pipelined over the batch grid)
    w1_ref : (Dp, Hp)  bf16   first linear weight, (in, out) layout (resident)
    sc1_ref: (2,  Hp)  f32    row 0 = folded BN1 scale, row 1 = bias+shift
    w2_ref : (Hp, Pp)  bf16   second linear weight (resident)
    sc2_ref: (2,  Pp)  f32    row 0 = folded BN2 scale, row 1 = bias+shift
    o_ref  : (TB, Pp)  f32    output tile
    """
    h = jnp.dot(x_ref[...], w1_ref[...], preferred_element_type=jnp.float32)
    h = h * sc1_ref[0:1, :] + sc1_ref[1:2, :]       # Linear-1 bias + BN1 (eval), folded
    h = jnp.maximum(h, 0.0)                         # ReLU
    y = jnp.dot(h.astype(jnp.bfloat16), w2_ref[...],
                preferred_element_type=jnp.float32)
    o_ref[...] = y * sc2_ref[0:1, :] + sc2_ref[1:2, :]   # Linear-2 bias + BN2 (eval)


def prepare_linear_critic_params(params, *, eps=1e-5):
    """One-time parameter preparation (hoisted out of the per-call path).

    Folds eval-mode BN + linear bias into per-feature f32 scale/shift and
    produces lane-padded bf16 weights:
        bn(z) = z*s + (beta - m*s),  z = x @ W + b
              = (x @ W)*s + ((b - m)*s + beta)
    """
    (w1, b1, g1, beta1, m1, v1,
     w2, b2, g2, beta2, m2, v2) = params
    D, H = w1.shape
    P = w2.shape[1]
    Dp, Hp, Pp = _pad_dim(D), _pad_dim(H), _pad_dim(P)

    s1 = g1 / jnp.sqrt(v1 + eps)
    c1 = (b1 - m1) * s1 + beta1
    s2 = g2 / jnp.sqrt(v2 + eps)
    c2 = (b2 - m2) * s2 + beta2

    w1_p = jnp.zeros((Dp, Hp), jnp.bfloat16).at[:D, :H].set(w1.astype(jnp.bfloat16))
    w2_p = jnp.zeros((Hp, Pp), jnp.bfloat16).at[:H, :P].set(w2.astype(jnp.bfloat16))
    # Pack scale/shift pairs into single (2, X) f32 refs (fewer tiny DMAs).
    sc1 = jnp.zeros((2, Hp), jnp.float32).at[0, :H].set(s1).at[1, :H].set(c1)
    sc2 = jnp.zeros((2, Pp), jnp.float32).at[0, :P].set(s2).at[1, :P].set(c2)

    return {"w1": w1_p, "sc1": sc1, "w2": w2_p, "sc2": sc2, "dims": (D, H, P)}


def linear_critic_forward(x, prepared, *, max_tile_b=512):
    """x: (B, latent_dim) f32. Returns (B, projection_dim) f32."""
    w1_p, sc1 = prepared["w1"], prepared["sc1"]
    w2_p, sc2 = prepared["w2"], prepared["sc2"]
    D, H, P = prepared["dims"]
    Dp, Hp = w1_p.shape
    Pp = w2_p.shape[1]
    B = x.shape[0]
    assert x.shape[1] == D

    # Batch tile: multiple of 16 (bf16 packs 16 rows per sublane group); when
    # the batch is big enough, use >=2 grid steps so the "parallel" batch axis
    # can be split across v7x's two TensorCores.
    tb = min(max_tile_b, _round_up(B, 16))
    two_step_tb = _round_up(pl.cdiv(B, 2), 16)
    if 16 <= two_step_tb < tb:
        tb = two_step_tb
    Bp = _round_up(B, tb)
    grid = (pl.cdiv(Bp, tb),)

    # Cast is always needed; pad only when the shape actually requires it.
    x_b = x.astype(jnp.bfloat16)
    if (Bp, Dp) != (B, D):
        x_b = jnp.pad(x_b, ((0, Bp - B), (0, Dp - D)))

    # Explicit VMEM budget: single-buffered resident weights + double-buffered
    # x/out tiles + headroom; never below the 32 MiB scoped default, never
    # above v7x's 64 MiB physical VMEM.
    resident_bytes = 2 * (Dp * Hp + Hp * Pp) + 4 * 8 * (Hp + Pp)
    pipelined_bytes = 2 * tb * (2 * Dp + 4 * Pp)
    vmem_limit = min(64 * 1024 * 1024,
                     max(32 * 1024 * 1024,
                         resident_bytes + pipelined_bytes + (2 << 20)))

    resident = lambda i: (0, 0)   # weights/scales stay put across batch tiles

    out = pl.pallas_call(
        _linear_critic_kernel,
        out_shape=jax.ShapeDtypeStruct((Bp, Pp), jnp.float32),
        grid=grid,
        in_specs=[
            pl.BlockSpec((tb, Dp), lambda i: (i, 0)),                          # x tile
            pl.BlockSpec((Dp, Hp), resident, pipeline_mode=pl.Buffered(1)),    # w1
            pl.BlockSpec((2,  Hp), resident, pipeline_mode=pl.Buffered(1)),    # BN1 s/c
            pl.BlockSpec((Hp, Pp), resident, pipeline_mode=pl.Buffered(1)),    # w2
            pl.BlockSpec((2,  Pp), resident, pipeline_mode=pl.Buffered(1)),    # BN2 s/c
        ],
        out_specs=pl.BlockSpec((tb, Pp), lambda i: (i, 0)),
        compiler_params=pltpu.CompilerParams(
            dimension_semantics=("parallel",),
            vmem_limit_bytes=int(vmem_limit)),
    )(x_b, w1_p, sc1, w2_p, sc2)

    if (Bp, Pp) != (B, P):
        out = out[:B, :P]
    return out


def _reference(x, params, eps=1e-5):
    """Plain-JAX f32 reference (eval-mode BatchNorm1d)."""
    (w1, b1, g1, beta1, m1, v1,
     w2, b2, g2, beta2, m2, v2) = params
    z = x @ w1 + b1
    z = (z - m1) / jnp.sqrt(v1 + eps) * g1 + beta1
    z = jnp.maximum(z, 0.0)
    y = z @ w2 + b2
    y = (y - m2) / jnp.sqrt(v2 + eps) * g2 + beta2
    return y


if __name__ == "__main__":
    # Small shapes consistent with the module: x is (batch, latent_dim).
    B, LATENT, PROJ = 2, 32, 32

    key = jax.random.PRNGKey(0)
    ks = jax.random.split(key, 13)

    x = jax.random.normal(ks[0], (B, LATENT), dtype=jnp.float32)

    # Linear weights stored in (in, out) layout (i.e. torch weight transposed).
    w1 = jax.random.normal(ks[1], (LATENT, LATENT), dtype=jnp.float32) * 0.1
    b1 = jax.random.normal(ks[2], (LATENT,), dtype=jnp.float32) * 0.05
    # BatchNorm1d #1 parameters / running stats.
    g1    = 1.0 + 0.1 * jax.random.normal(ks[3], (LATENT,), dtype=jnp.float32)
    beta1 = 0.05 * jax.random.normal(ks[4], (LATENT,), dtype=jnp.float32)
    m1    = 0.1 * jax.random.normal(ks[5], (LATENT,), dtype=jnp.float32)
    v1    = 0.5 + jax.random.uniform(ks[6], (LATENT,), dtype=jnp.float32)

    w2 = jax.random.normal(ks[7], (LATENT, PROJ), dtype=jnp.float32) * 0.1
    b2 = jax.random.normal(ks[8], (PROJ,), dtype=jnp.float32) * 0.05
    # BatchNorm1d #2 parameters / running stats.
    g2    = 1.0 + 0.1 * jax.random.normal(ks[9], (PROJ,), dtype=jnp.float32)
    beta2 = 0.05 * jax.random.normal(ks[10], (PROJ,), dtype=jnp.float32)
    m2    = 0.1 * jax.random.normal(ks[11], (PROJ,), dtype=jnp.float32)
    v2    = 0.5 + jax.random.uniform(ks[12], (PROJ,), dtype=jnp.float32)

    params = (w1, b1, g1, beta1, m1, v1, w2, b2, g2, beta2, m2, v2)

    # One-time parameter prep (folding + padding + bf16 cast) outside the
    # per-call path, then a single fused forward.
    prepared = prepare_linear_critic_params(params)
    out = linear_critic_forward(x, prepared)
    out = jax.block_until_ready(out)

    ref = _reference(x, params)
    assert out.shape == (B, PROJ), out.shape
    # bf16 matmul operands (f32 accumulation) -> slightly looser tolerance.
    assert jnp.allclose(out, ref, atol=2e-2, rtol=2e-2), (out, ref)

    print("KERNEL_OK")
</pallas_src>

<mosaic_0001>
module attributes {stable_mosaic.version = 11 : i64} {
  func.func @_linear_critic_kernel(%arg0: i32, %arg1: memref<16x128xbf16, #tpu.memory_space<vmem>>, %arg2: memref<128x128xbf16, #tpu.memory_space<vmem>>, %arg3: memref<2x128xf32, #tpu.memory_space<vmem>>, %arg4: memref<128x128xbf16, #tpu.memory_space<vmem>>, %arg5: memref<2x128xf32, #tpu.memory_space<vmem>>, %arg6: memref<16x128xf32, #tpu.memory_space<vmem>>) attributes {dimension_semantics = [#tpu.dimension_semantics<parallel>], iteration_bounds = array<i64: 1>, scalar_prefetch = 0 : i64, scratch_operands = 0 : i64, tpu.core_type = #tpu.core_type<tc>, window_params = [{transform_indices = @transform_0, window_bounds = array<i64: 16, 128>}, {pipeline_mode = #tpu.pipeline_mode<synchronous>, transform_indices = @transform_1, window_bounds = array<i64: 128, 128>}, {pipeline_mode = #tpu.pipeline_mode<synchronous>, transform_indices = @transform_2, window_bounds = array<i64: 2, 128>}, {pipeline_mode = #tpu.pipeline_mode<synchronous>, transform_indices = @transform_3, window_bounds = array<i64: 128, 128>}, {pipeline_mode = #tpu.pipeline_mode<synchronous>, transform_indices = @transform_4, window_bounds = array<i64: 2, 128>}, {transform_indices = @transform_5, window_bounds = array<i64: 16, 128>}]} {
    %c0 = arith.constant 0 : index
    %c0_0 = arith.constant 0 : index
    %0 = vector.load %arg1[%c0, %c0_0] : memref<16x128xbf16, #tpu.memory_space<vmem>>, vector<16x128xbf16>
    %c0_1 = arith.constant 0 : index
    %c0_2 = arith.constant 0 : index
    %1 = vector.load %arg2[%c0_1, %c0_2] : memref<128x128xbf16, #tpu.memory_space<vmem>>, vector<128x128xbf16>
    %cst = arith.constant dense<0.000000e+00> : vector<16x128xf32>
    %2 = tpu.matmul %0, %1, %cst {dimension_numbers = #tpu.dot_dimension_numbers<[1], [0], [0], [1], [0, 0, 1, 1], [], []>} : vector<16x128xbf16>, vector<128x128xbf16>, vector<16x128xf32> -> vector<16x128xf32>
    %c0_3 = arith.constant 0 : index
    %c0_4 = arith.constant 0 : index
    %3 = vector.load %arg3[%c0_3, %c0_4] : memref<2x128xf32, #tpu.memory_space<vmem>>, vector<1x128xf32>
    %4 = vector.broadcast %3 : vector<1x128xf32> to vector<16x128xf32>
    %5 = arith.mulf %2, %4 : vector<16x128xf32>
    %c1 = arith.constant 1 : index
    %c0_5 = arith.constant 0 : index
    %6 = vector.load %arg3[%c1, %c0_5] : memref<2x128xf32, #tpu.memory_space<vmem>>, vector<1x128xf32>
    %7 = vector.broadcast %6 : vector<1x128xf32> to vector<16x128xf32>
    %8 = arith.addf %5, %7 : vector<16x128xf32>
    %cst_6 = arith.constant 0.000000e+00 : f32
    %9 = vector.broadcast %cst_6 : f32 to vector<16x128xf32>
    %10 = arith.maximumf %8, %9 : vector<16x128xf32>
    %11 = arith.truncf %10 : vector<16x128xf32> to vector<16x128xbf16>
    %c0_7 = arith.constant 0 : index
    %c0_8 = arith.constant 0 : index
    %12 = vector.load %arg4[%c0_7, %c0_8] : memref<128x128xbf16, #tpu.memory_space<vmem>>, vector<128x128xbf16>
    %cst_9 = arith.constant dense<0.000000e+00> : vector<16x128xf32>
    %13 = tpu.matmul %11, %12, %cst_9 {dimension_numbers = #tpu.dot_dimension_numbers<[1], [0], [0], [1], [0, 0, 1, 1], [], []>} : vector<16x128xbf16>, vector<128x128xbf16>, vector<16x128xf32> -> vector<16x128xf32>
    %c0_10 = arith.constant 0 : index
    %c0_11 = arith.constant 0 : index
    %14 = vector.load %arg5[%c0_10, %c0_11] : memref<2x128xf32, #tpu.memory_space<vmem>>, vector<1x128xf32>
    %15 = vector.broadcast %14 : vector<1x128xf32> to vector<16x128xf32>
    %16 = arith.mulf %13, %15 : vector<16x128xf32>
    %c1_12 = arith.constant 1 : index
    %c0_13 = arith.constant 0 : index
    %17 = vector.load %arg5[%c1_12, %c0_13] : memref<2x128xf32, #tpu.memory_space<vmem>>, vector<1x128xf32>
    %18 = vector.broadcast %17 : vector<1x128xf32> to vector<16x128xf32>
    %19 = arith.addf %16, %18 : vector<16x128xf32>
    %c0_14 = arith.constant 0 : index
    %c0_15 = arith.constant 0 : index
    %20 = vector.load %arg6[%c0_14, %c0_15] : memref<16x128xf32, #tpu.memory_space<vmem>>, vector<16x128xf32>
    tpu.vector_store %arg6[%c0_14, %c0_15], %19 {strides = array<i32>} : memref<16x128xf32, #tpu.memory_space<vmem>>, vector<16x128xf32>,
    return
  }
  func.func @transform_0(%arg0: i32) -> (i32, i32) {
    %c0_i32 = arith.constant 0 : i32
    %c0_i32_0 = arith.constant 0 : i32
    return %arg0, %c0_i32 : i32, i32
  }
  func.func @transform_1(%arg0: i32) -> (i32, i32) {
    %c0_i32 = arith.constant 0 : i32
    %c0_i32_0 = arith.constant 0 : i32
    %c0_i32_1 = arith.constant 0 : i32
    return %c0_i32, %c0_i32_0 : i32, i32
  }
  func.func @transform_2(%arg0: i32) -> (i32, i32) {
    %c0_i32 = arith.constant 0 : i32
    %c0_i32_0 = arith.constant 0 : i32
    %c0_i32_1 = arith.constant 0 : i32
    return %c0_i32, %c0_i32_0 : i32, i32
  }
  func.func @transform_3(%arg0: i32) -> (i32, i32) {
    %c0_i32 = arith.constant 0 : i32
    %c0_i32_0 = arith.constant 0 : i32
    %c0_i32_1 = arith.constant 0 : i32
    return %c0_i32, %c0_i32_0 : i32, i32
  }
  func.func @transform_4(%arg0: i32) -> (i32, i32) {
    %c0_i32 = arith.constant 0 : i32
    %c0_i32_0 = arith.constant 0 : i32
    %c0_i32_1 = arith.constant 0 : i32
    return %c0_i32, %c0_i32_0 : i32, i32
  }
  func.func @transform_5(%arg0: i32) -> (i32, i32) {
    %c0_i32 = arith.constant 0 : i32
    %c0_i32_0 = arith.constant 0 : i32
    return %arg0, %c0_i32 : i32, i32
  }
}

</mosaic_0001>

<llo_original>
// kernel: tpu_custom_call.1
$region0: #{tpu_custom_call.1}
  #allocation0 [shape = 'u32[]', space=smem, size = 0x4, offset = 0x4, fixed_abs, tag = 'smem constant byte address 0x4 - core index']
  #allocation1 [shape = 'u32[144,128]{1,0:T(1,128)}', space=vmem, size = 0x12000, scoped, tag = 'internal scratch']
  %s0 = inlined_call_operand.hbm [shape: bf16[16,128], index: 0, kind: input, shape index: {}]
  %s1 = inlined_call_operand.hbm [shape: bf16[128,128], index: 1, kind: input, shape index: {}]
  %s2 = inlined_call_operand.vmem [shape: f32[2,128], index: 2, kind: input, shape index: {}]
  %s3 = inlined_call_operand.hbm [shape: bf16[128,128], index: 3, kind: input, shape index: {}]
  %s4 = inlined_call_operand.vmem [shape: f32[2,128], index: 4, kind: input, shape index: {}]
  %s5 = inlined_call_operand.hbm [shape: f32[16,128], index: 5, kind: output, shape index: {}]
  %s6 = sld [smem:[#allocation0]]
  $region42: #{tpu_custom_call.1} parent=0
    _
  %s8 = ssub.s32 1, %s6
  %s9 = scalar_select 0, %s8, %s6
  $region1: #{tpu_custom_call.1} parent=0
    #allocation2 [shape = 'u8[4096]{0}', space=vmem, size = 0x1000, scoped, tag = 'input window, operand 0, single buffered']
    #allocation3 [shape = 's32[1]{0}', space=sflag, size = 0x4, scoped, tag = 'scoped memory for tpu_custom_call.1']
    #allocation4 [shape = 's32[1]{0}', space=sflag, size = 0x4, scoped, tag = 'scoped memory for tpu_custom_call.1']
    #allocation5 [shape = 'u8[32768]{0}', space=vmem, size = 0x8000, scoped, tag = 'input window, operand 1, single buffered']
    #allocation6 [shape = 's32[1]{0}', space=sflag, size = 0x4, scoped, tag = 'scoped memory for tpu_custom_call.1']
    #allocation7 [shape = 'u8[32768]{0}', space=vmem, size = 0x8000, scoped, tag = 'input window, operand 3, single buffered']
    #allocation8 [shape = 'u8[8192]{0}', space=vmem, size = 0x2000, scoped, tag = 'output window, operand 0, single buffered']
    %10 = vsyncpa [#allocation3], 0
    %11 = vsyncpa [#allocation6], 0
    %12 = vsyncpa [#allocation4], 0
    // Predicated region
    $region2: #{tpu_custom_call.1} parent=1 // pred_check
      _
    $region3: #{tpu_custom_call.1} parent=1 // pred_check_branch
      %14 = sbr.rel (0) target = $region5
    $region4: #{tpu_custom_call.1} parent=1 // pred_region
      %s16 = ssub.s32 128, 128
      %17 = vsyncadd [#allocation3], %s16
      %s18 = sshll.u32 [#allocation2], 4
      %s19 = int_to_ptr.vmem [resolvable:$true] %s18
      %24 = dma.hbm_to_vmem [thread:$0]  %s0, 128, %s19, [#allocation3], 64, 64, 4
    $region5: #{tpu_custom_call.1} parent=1 // pred_fallthru
      _
    // Predicated region
    $region6: #{tpu_custom_call.1} parent=1 // pred_check
      _
    $region7: #{tpu_custom_call.1} parent=1 // pred_check_branch
      %26 = sbr.rel (0) target = $region9
    $region8: #{tpu_custom_call.1} parent=1 // pred_region
      %s28 = ssub.s32 1024, 1024
      %29 = vsyncadd [#allocation6], %s28
      %s30 = sshll.u32 [#allocation5], 4
      %s31 = int_to_ptr.vmem [resolvable:$true] %s30
      %36 = dma.hbm_to_vmem [thread:$0]  %s1, 1024, %s31, [#allocation6], 64, 64, 4
    $region9: #{tpu_custom_call.1} parent=1 // pred_fallthru
      _
    // Predicated region
    $region10: #{tpu_custom_call.1} parent=1 // pred_check
      _
    $region11: #{tpu_custom_call.1} parent=1 // pred_check_branch
      %38 = sbr.rel (0) target = $region13
    $region12: #{tpu_custom_call.1} parent=1 // pred_region
      _
    $region13: #{tpu_custom_call.1} parent=1 // pred_fallthru
      _
    // Predicated region
    $region14: #{tpu_custom_call.1} parent=1 // pred_check
      _
    $region15: #{tpu_custom_call.1} parent=1 // pred_check_branch
      %40 = sbr.rel (0) target = $region17
    $region16: #{tpu_custom_call.1} parent=1 // pred_region
      %s42 = ssub.s32 1024, 1024
      %43 = vsyncadd [#allocation6], %s42
      %s44 = sshll.u32 [#allocation7], 4
      %s45 = int_to_ptr.vmem [resolvable:$true] %s44
      %50 = dma.hbm_to_vmem [thread:$0]  %s3, 1024, %s45, [#allocation6], 64, 64, 4
    $region17: #{tpu_custom_call.1} parent=1 // pred_fallthru
      _
    // Predicated region
    $region18: #{tpu_custom_call.1} parent=1 // pred_check
      _
    $region19: #{tpu_custom_call.1} parent=1 // pred_check_branch
      %52 = sbr.rel (0) target = $region21
    $region20: #{tpu_custom_call.1} parent=1 // pred_region
      _
    $region21: #{tpu_custom_call.1} parent=1 // pred_fallthru
      _
    // Predicated region
    $region22: #{tpu_custom_call.1} parent=1 // pred_check
      _
    $region23: #{tpu_custom_call.1} parent=1 // pred_check_branch
      %54 = sbr.rel (0) target = $region25
    $region24: #{tpu_custom_call.1} parent=1 // pred_region
      %55 = dma.done [#allocation3], 128
    $region25: #{tpu_custom_call.1} parent=1 // pred_fallthru
      _
    // Predicated region
    $region26: #{tpu_custom_call.1} parent=1 // pred_check
      _
    $region27: #{tpu_custom_call.1} parent=1 // pred_check_branch
      %57 = sbr.rel (0) target = $region29
    $region28: #{tpu_custom_call.1} parent=1 // pred_region
      %58 = dma.done [#allocation6], 1024
    $region29: #{tpu_custom_call.1} parent=1 // pred_fallthru
      _
    // Predicated region
    $region30: #{tpu_custom_call.1} parent=1 // pred_check
      _
    $region31: #{tpu_custom_call.1} parent=1 // pred_check_branch
      %60 = sbr.rel (0) target = $region33
    $region32: #{tpu_custom_call.1} parent=1 // pred_region
      %61 = dma.done [#allocation6], 1024
    $region33: #{tpu_custom_call.1} parent=1 // pred_fallthru
      _
    %v63 = vld [vmem:[#allocation2] sm:$0xf]
    %v64 = vld [vmem:[#allocation2 + $0x4] sm:$0xf]
    %v65 = vld [vmem:[#allocation5] sm:$0xf]
    %v66 = vld [vmem:[#allocation5 + $0x4] sm:$0xf]
    %v67 = vld [vmem:[#allocation5 + $0x8] sm:$0xf]
    %v68 = vld [vmem:[#allocation5 + $0xc] sm:$0xf]
    %v69 = vld [vmem:[#allocation5 + $0x10] sm:$0xf]
    %v70 = vld [vmem:[#allocation5 + $0x14] sm:$0xf]
    %v71 = vld [vmem:[#allocation5 + $0x18] sm:$0xf]
    %v72 = vld [vmem:[#allocation5 + $0x1c] sm:$0xf]
    %v73 = vld [vmem:[#allocation5 + $0x20] sm:$0xf]
    %v74 = vld [vmem:[#allocation5 + $0x24] sm:$0xf]
    %v75 = vld [vmem:[#allocation5 + $0x28] sm:$0xf]
    %v76 = vld [vmem:[#allocation5 + $0x2c] sm:$0xf]
    %v77 = vld [vmem:[#allocation5 + $0x30] sm:$0xf]
    %v78 = vld [vmem:[#allocation5 + $0x34] sm:$0xf]
    %v79 = vld [vmem:[#allocation5 + $0x38] sm:$0xf]
    %v80 = vld [vmem:[#allocation5 + $0x3c] sm:$0xf]
    %v83 = vunpack.c.l.b16 %v63
    %v84 = vunpack.c.l.b16 %v64
    %v85 = vpack.c.b16 %v84, %v83
    %v103 = vunpack.c.l.b16 %v65
    %v104 = vunpack.c.l.b16 %v66
    %v105 = vunpack.c.l.b16 %v67
    %v106 = vunpack.c.l.b16 %v68
    %v107 = vunpack.c.l.b16 %v69
    %v108 = vunpack.c.l.b16 %v70
    %v109 = vunpack.c.l.b16 %v71
    %v110 = vunpack.c.l.b16 %v72
    %v111 = vunpack.c.l.b16 %v73
    %v112 = vunpack.c.l.b16 %v74
    %v113 = vunpack.c.l.b16 %v75
    %v114 = vunpack.c.l.b16 %v76
    %v115 = vunpack.c.l.b16 %v77
    %v116 = vunpack.c.l.b16 %v78
    %v117 = vunpack.c.l.b16 %v79
    %v118 = vunpack.c.l.b16 %v80
    %v119 = vpack.c.b16 %v104, %v103
    %v120 = vpack.c.b16 %v106, %v105
    %v121 = vpack.c.b16 %v108, %v107
    %v122 = vpack.c.b16 %v110, %v109
    %v123 = vpack.c.b16 %v112, %v111
    %v124 = vpack.c.b16 %v114, %v113
    %v125 = vpack.c.b16 %v116, %v115
    %v126 = vpack.c.b16 %v118, %v117
    %135 = vmatprep.subr.bf16.mxu0 0
    %136 = vmatpush1.bf16.msra.mxu0 %v126
    %137 = vmatprep.subr.bf16.mxu0 0
    %138 = vmatpush1.bf16.msra.mxu0 %v125
    %139 = vmatprep.subr.bf16.mxu0 0
    %140 = vmatpush1.bf16.msra.mxu0 %v124
    %141 = vmatprep.subr.bf16.mxu0 0
    %142 = vmatpush1.bf16.msra.mxu0 %v123
    %143 = vmatprep.subr.bf16.mxu0 0
    %144 = vmatpush1.bf16.msra.mxu0 %v122
    %145 = vmatprep.subr.bf16.mxu0 0
    %146 = vmatpush1.bf16.msra.mxu0 %v121
    %147 = vmatprep.subr.bf16.mxu0 0
    %148 = vmatpush1.bf16.msra.mxu0 %v120
    %149 = vmatprep.subr.bf16.mxu0 0
    %150 = vmatpush1.bf16.msra.mxu0 %v119
    %151 = vmatprep.subr.bf16.mxu0 0
    %152 = vmatpush2.bf16.msra.mxu0 0
    %153 = vmatprep.subr.bf16.mxu0 0
    %154 = vmatpush2.bf16.msra.mxu0 0
    %155 = vmatprep.subr.bf16.mxu0 0
    %156 = vmatpush2.bf16.msra.mxu0 0
    %157 = vmatprep.subr.bf16.mxu0 0
    %158 = vmatpush2.bf16.msra.mxu0 0
    %159 = vmatprep.subr.bf16.mxu0 0
    %160 = vmatpush2.bf16.msra.mxu0 0
    %161 = vmatprep.subr.bf16.mxu0 0
    %162 = vmatpush2.bf16.msra.mxu0 0
    %163 = vmatprep.subr.bf16.mxu0 0
    %164 = vmatpush2.bf16.msra.mxu0 0
    %165 = vmatprep.subr.bf16.mxu0 0
    %166 = vmatpush2.bf16.msra.mxu0 0
    %167 = vmatprep.mubr.bf16.mxu0 0
    %168 = vmatmul.mubr.bf16.gmra.mxu0 %v85
    %v169 = vpop.f32.mrf.mxu0
    %v170 = vadd.f32 0.0, %v169
    %v171 = vpop.f32.mrf.mxu0
    %v172 = vpop.f32.mrf.mxu0
    %v173 = vadd.f32 0.0, %v172
    %v174 = vpop.f32.mrf.mxu0
    %175 = vdwg.mxu0
    %v176 = vld [vmem:[%s2] sm:$0x1]
    %v177 = vlaneseq
    %v178 = vshrl.u32 %v177, 7
    %v179 = vsub.s32 0, %v178
    %v180 = vrot.slane %v176, %v179
    %v181 = vmul.f32 %v170, %v180
    %v182 = vmul.f32 %v173, %v180
    %v183 = vld [vmem:[%s2 + $0x1] sm:$0x1]
    %v184 = vlaneseq
    %v185 = vshrl.u32 %v184, 7
    %v186 = vsub.s32 0, %v185
    %v187 = vrot.slane %v183, %v186
    %v188 = vadd.f32 %v181, %v187
    %v189 = vadd.f32 %v182, %v187
    %v190 = vmax.f32 %v188, 0.0
    %v191 = vmax.f32 %v189, 0.0
    %v192 = vpack.c.bf16 %v191, %v190
    %v193 = vld [vmem:[#allocation7] sm:$0xf]
    %v194 = vld [vmem:[#allocation7 + $0x4] sm:$0xf]
    %v195 = vld [vmem:[#allocation7 + $0x8] sm:$0xf]
    %v196 = vld [vmem:[#allocation7 + $0xc] sm:$0xf]
    %v197 = vld [vmem:[#allocation7 + $0x10] sm:$0xf]
    %v198 = vld [vmem:[#allocation7 + $0x14] sm:$0xf]
    %v199 = vld [vmem:[#allocation7 + $0x18] sm:$0xf]
    %v200 = vld [vmem:[#allocation7 + $0x1c] sm:$0xf]
    %v201 = vld [vmem:[#allocation7 + $0x20] sm:$0xf]
    %v202 = vld [vmem:[#allocation7 + $0x24] sm:$0xf]
    %v203 = vld [vmem:[#allocation7 + $0x28] sm:$0xf]
    %v204 = vld [vmem:[#allocation7 + $0x2c] sm:$0xf]
    %v205 = vld [vmem:[#allocation7 + $0x30] sm:$0xf]
    %v206 = vld [vmem:[#allocation7 + $0x34] sm:$0xf]
    %v207 = vld [vmem:[#allocation7 + $0x38] sm:$0xf]
    %v208 = vld [vmem:[#allocation7 + $0x3c] sm:$0xf]
    %v225 = vunpack.c.l.b16 %v193
    %v226 = vunpack.c.l.b16 %v194
    %v227 = vunpack.c.l.b16 %v195
    %v228 = vunpack.c.l.b16 %v196
    %v229 = vunpack.c.l.b16 %v197
    %v230 = vunpack.c.l.b16 %v198
    %v231 = vunpack.c.l.b16 %v199
    %v232 = vunpack.c.l.b16 %v200
    %v233 = vunpack.c.l.b16 %v201
    %v234 = vunpack.c.l.b16 %v202
    %v235 = vunpack.c.l.b16 %v203
    %v236 = vunpack.c.l.b16 %v204
    %v237 = vunpack.c.l.b16 %v205
    %v238 = vunpack.c.l.b16 %v206
    %v239 = vunpack.c.l.b16 %v207
    %v240 = vunpack.c.l.b16 %v208
    %v241 = vpack.c.b16 %v226, %v225
    %v242 = vpack.c.b16 %v228, %v227
    %v243 = vpack.c.b16 %v230, %v229
    %v244 = vpack.c.b16 %v232, %v231
    %v245 = vpack.c.b16 %v234, %v233
    %v246 = vpack.c.b16 %v236, %v235
    %v247 = vpack.c.b16 %v238, %v237
    %v248 = vpack.c.b16 %v240, %v239
    %257 = vmatprep.subr.bf16.mxu0 0
    %258 = vmatpush1.bf16.msra.mxu0 %v248
    %259 = vmatprep.subr.bf16.mxu0 0
    %260 = vmatpush1.bf16.msra.mxu0 %v247
    %261 = vmatprep.subr.bf16.mxu0 0
    %262 = vmatpush1.bf16.msra.mxu0 %v246
    %263 = vmatprep.subr.bf16.mxu0 0
    %264 = vmatpush1.bf16.msra.mxu0 %v245
    %265 = vmatprep.subr.bf16.mxu0 0
    %266 = vmatpush1.bf16.msra.mxu0 %v244
    %267 = vmatprep.subr.bf16.mxu0 0
    %268 = vmatpush1.bf16.msra.mxu0 %v243
    %269 = vmatprep.subr.bf16.mxu0 0
    %270 = vmatpush1.bf16.msra.mxu0 %v242
    %271 = vmatprep.subr.bf16.mxu0 0
    %272 = vmatpush1.bf16.msra.mxu0 %v241
    %273 = vmatprep.subr.bf16.mxu0 0
    %274 = vmatpush2.bf16.msra.mxu0 0
    %275 = vmatprep.subr.bf16.mxu0 0
    %276 = vmatpush2.bf16.msra.mxu0 0
    %277 = vmatprep.subr.bf16.mxu0 0
    %278 = vmatpush2.bf16.msra.mxu0 0
    %279 = vmatprep.subr.bf16.mxu0 0
    %280 = vmatpush2.bf16.msra.mxu0 0
    %281 = vmatprep.subr.bf16.mxu0 0
    %282 = vmatpush2.bf16.msra.mxu0 0
    %283 = vmatprep.subr.bf16.mxu0 0
    %284 = vmatpush2.bf16.msra.mxu0 0
    %285 = vmatprep.subr.bf16.mxu0 0
    %286 = vmatpush2.bf16.msra.mxu0 0
    %287 = vmatprep.subr.bf16.mxu0 0
    %288 = vmatpush2.bf16.msra.mxu0 0
    %289 = vmatprep.mubr.bf16.mxu0 0
    %290 = vmatmul.mubr.bf16.gmra.mxu0 %v192
    %v291 = vpop.f32.mrf.mxu0
    %v292 = vadd.f32 0.0, %v291
    %v293 = vpop.f32.mrf.mxu0
    %v294 = vpop.f32.mrf.mxu0
    %v295 = vadd.f32 0.0, %v294
    %v296 = vpop.f32.mrf.mxu0
    %297 = vdwg.mxu0
    %v298 = vld [vmem:[%s4] sm:$0x1]
    %v299 = vlaneseq
    %v300 = vshrl.u32 %v299, 7
    %v301 = vsub.s32 0, %v300
    %v302 = vrot.slane %v298, %v301
    %v303 = vmul.f32 %v292, %v302
    %v304 = vmul.f32 %v295, %v302
    %v305 = vld [vmem:[%s4 + $0x1] sm:$0x1]
    %v306 = vlaneseq
    %v307 = vshrl.u32 %v306, 7
    %v308 = vsub.s32 0, %v307
    %v309 = vrot.slane %v305, %v308
    %v310 = vadd.f32 %v303, %v309
    %v311 = vadd.f32 %v304, %v309
    %312 = vst [vmem:[#allocation8] sm:$0xff] %v310
    %313 = vst [vmem:[#allocation8 + $0x8] sm:$0xff] %v311
    // Predicated region
    $region34: #{tpu_custom_call.1} parent=1 // pred_check
      _
    $region35: #{tpu_custom_call.1} parent=1 // pred_check_branch
      %315 = sbr.rel (0) target = $region37
    $region36: #{tpu_custom_call.1} parent=1 // pred_region
      %s317 = ssub.s32 256, 256
      %318 = vsyncadd [#allocation4], %s317
      %s319 = sshll.u32 [#allocation8], 4
      %s320 = int_to_ptr.vmem [resolvable:$true] %s319
      %325 = dma.vmem_to_hbm [thread:$0]  %s320, 256, %s5, [#allocation4], 128, 128, 8
    $region37: #{tpu_custom_call.1} parent=1 // pred_fallthru
      _
    // Predicated region
    $region38: #{tpu_custom_call.1} parent=1 // pred_check
      _
    $region39: #{tpu_custom_call.1} parent=1 // pred_check_branch
      %327 = sbr.rel (0) target = $region41
    $region40: #{tpu_custom_call.1} parent=1 // pred_region
      %328 = dma.done [#allocation4], 256
    $region41: #{tpu_custom_call.1} parent=1 // pred_fallthru
      _
    %329 = vsyncpa [#allocation3], 1
    %330 = vsyncpa [#allocation6], 1
    %331 = vsyncpa [#allocation4], 1

</llo_original>
